<compile_context>
chip_gen: v6e
topology: v6e:2x2x1
jax: 0.10.0
libtpu: 0.0.40
codegen_flags: <defaults>
</compile_context>

<pallas_src>
import jax
import jax.numpy as jnp
from jax.experimental import pallas as pl
from jax.experimental.pallas import tpu as pltpu

NEG_SLOPE = 0.01   # torch.nn.LeakyReLU default
HIDDEN = 64


def _leaky_relu(x):
    return jnp.where(x > 0, x, NEG_SLOPE * x)


def _softplus(r):
    # Numerically stable softplus; pure elementwise ops (VPU/EUP), no overflow.
    return jnp.log1p(jnp.exp(-jnp.abs(r))) + jnp.maximum(r, 0.0)


def mlp_kernel(x_ref, w1_ref, b1_ref, w2_ref, b2_ref,
               wmu_ref, wrho_ref, epsw_ref, bmu_ref, brho_ref, epsb_ref,
               o_ref):
    """Fused 3-layer MLP on one (TB, *) batch tile, everything VMEM-resident."""
    # ---- layer 1: Linear(1, 64). K=1 -> broadcast multiply on the VPU ------
    x = x_ref[...]                                          # (TB, 1)
    h = _leaky_relu(x * w1_ref[...] + b1_ref[...])          # (TB, 64)

    # ---- layer 2: Linear(64, 64) on the MXU ---------------------------------
    h = jnp.dot(h, w2_ref[...], preferred_element_type=jnp.float32)
    h = _leaky_relu(h + b2_ref[...])                        # (TB, 64)

    # ---- layer 3: BayesianLinear(64, 1), reparameterization fused in-kernel -
    w3 = wmu_ref[...] + _softplus(wrho_ref[...]) * epsw_ref[...]   # (1, 64)
    b3 = bmu_ref[...] + _softplus(brho_ref[...]) * epsb_ref[...]   # (1, 1)
    # N=1 output -> elementwise multiply + lane reduction (XLU), not the MXU.
    out = jnp.sum(h * w3, axis=-1, keepdims=True) + b3             # (TB, 1)
    o_ref[...] = out.astype(o_ref.dtype)


def _round_up(n, m):
    return ((n + m - 1) // m) * m


def example_forward(x, params, *, max_tile=512):
    """x: (B, 1) float32. Returns (B, 1) float32."""
    B = x.shape[0]
    TB = min(max_tile, _round_up(B, 8))       # batch tile: multiple of 8 sublanes
    B_pad = _round_up(B, TB)
    if B_pad != B:
        x = jnp.pad(x, ((0, B_pad - B), (0, 0)))
    grid = (pl.cdiv(B_pad, TB),)

    def const(a):
        # Full-array block, same block every grid step -> stays VMEM-resident.
        return pl.BlockSpec(a.shape, lambda i: (0,) * a.ndim)

    out = pl.pallas_call(
        mlp_kernel,
        out_shape=jax.ShapeDtypeStruct((B_pad, 1), jnp.float32),
        grid=grid,
        in_specs=[
            pl.BlockSpec((TB, 1), lambda i: (i, 0)),          # x: tiled over batch
            const(params["w1"]), const(params["b1"]),
            const(params["w2"]), const(params["b2"]),
            const(params["weight_mu"]), const(params["weight_rho"]),
            const(params["eps_w"]),
            const(params["bias_mu"]), const(params["bias_rho"]),
            const(params["eps_b"]),
        ],
        out_specs=pl.BlockSpec((TB, 1), lambda i: (i, 0)),
        compiler_params=pltpu.CompilerParams(
            dimension_semantics=("parallel",)),               # v7x: 2 TCs
    )(x, params["w1"], params["b1"], params["w2"], params["b2"],
      params["weight_mu"], params["weight_rho"], params["eps_w"],
      params["bias_mu"], params["bias_rho"], params["eps_b"])
    return out[:B]


def init_params(key):
    """Parameters mirroring the module's shapes.

    nn.Linear(1,64)   -> w1 stored transposed as (1, 64), b1 (1, 64)
    nn.Linear(64,64)  -> w2 stored transposed as (64, 64), b2 (1, 64)
    BayesianLinear(64,1) -> weight_mu/rho (1, 64) [= (out,in)], bias_mu/rho (1,1)
    eps_w / eps_b: the Gaussian noise used by the reparameterization trick
    (drawn once here; the mu + softplus(rho)*eps math itself runs in-kernel).
    """
    ks = jax.random.split(key, 8)
    scale = 0.1

    w1 = scale * jax.random.normal(ks[0], (1, HIDDEN), jnp.float32)
    b1 = scale * jax.random.normal(ks[1], (1, HIDDEN), jnp.float32)
    w2 = scale * jax.random.normal(ks[2], (HIDDEN, HIDDEN), jnp.float32)
    b2 = scale * jax.random.normal(ks[3], (1, HIDDEN), jnp.float32)

    weight_mu = scale * jax.random.normal(ks[4], (1, HIDDEN), jnp.float32)
    weight_rho = jnp.full((1, HIDDEN), -7.0, jnp.float32)
    bias_mu = scale * jax.random.normal(ks[5], (1, 1), jnp.float32)
    bias_rho = jnp.full((1, 1), -7.0, jnp.float32)

    eps_w = jax.random.normal(ks[6], (1, HIDDEN), jnp.float32)
    eps_b = jax.random.normal(ks[7], (1, 1), jnp.float32)

    return dict(w1=w1, b1=b1, w2=w2, b2=b2,
                weight_mu=weight_mu, weight_rho=weight_rho, eps_w=eps_w,
                bias_mu=bias_mu, bias_rho=bias_rho, eps_b=eps_b)


def reference_forward(x, params):
    """Pure-JAX reference (same math, same softplus) for correctness check."""
    h = _leaky_relu(x @ params["w1"] + params["b1"])
    h = _leaky_relu(h @ params["w2"] + params["b2"])
    w3 = params["weight_mu"] + _softplus(params["weight_rho"]) * params["eps_w"]
    b3 = params["bias_mu"] + _softplus(params["bias_rho"]) * params["eps_b"]
    return h @ w3.T + b3


if __name__ == "__main__":
    key = jax.random.PRNGKey(0)
    k_param, k_x = jax.random.split(key)

    B = 8
    x = jax.random.normal(k_x, (B, 1), jnp.float32)   # (batch, 1) input features

    params = init_params(k_param)

    out = example_forward(x, params)
    out = jax.block_until_ready(out)

    ref = reference_forward(x, params)
    assert out.shape == (B, 1)
    assert jnp.allclose(out, ref, atol=1e-5, rtol=1e-5), "mismatch vs reference"

    print("KERNEL_OK")
</pallas_src>

<mosaic_0001>
module attributes {stable_mosaic.version = 11 : i64} {
  func.func @mlp_kernel(%arg0: i32, %arg1: memref<8x1xf32, #tpu.memory_space<vmem>>, %arg2: memref<1x64xf32, #tpu.memory_space<vmem>>, %arg3: memref<1x64xf32, #tpu.memory_space<vmem>>, %arg4: memref<64x64xf32, #tpu.memory_space<vmem>>, %arg5: memref<1x64xf32, #tpu.memory_space<vmem>>, %arg6: memref<1x64xf32, #tpu.memory_space<vmem>>, %arg7: memref<1x64xf32, #tpu.memory_space<vmem>>, %arg8: memref<1x64xf32, #tpu.memory_space<vmem>>, %arg9: memref<1x1xf32, #tpu.memory_space<vmem>>, %arg10: memref<1x1xf32, #tpu.memory_space<vmem>>, %arg11: memref<1x1xf32, #tpu.memory_space<vmem>>, %arg12: memref<8x1xf32, #tpu.memory_space<vmem>>) attributes {dimension_semantics = [#tpu.dimension_semantics<parallel>], iteration_bounds = array<i64: 1>, scalar_prefetch = 0 : i64, scratch_operands = 0 : i64, tpu.core_type = #tpu.core_type<tc>, window_params = [{transform_indices = @transform_0, window_bounds = array<i64: 8, 1>}, {pipeline_mode = #tpu.pipeline_mode<synchronous>, transform_indices = @transform_1, window_bounds = array<i64: 1, 64>}, {pipeline_mode = #tpu.pipeline_mode<synchronous>, transform_indices = @transform_2, window_bounds = array<i64: 1, 64>}, {pipeline_mode = #tpu.pipeline_mode<synchronous>, transform_indices = @transform_3, window_bounds = array<i64: 64, 64>}, {pipeline_mode = #tpu.pipeline_mode<synchronous>, transform_indices = @transform_4, window_bounds = array<i64: 1, 64>}, {pipeline_mode = #tpu.pipeline_mode<synchronous>, transform_indices = @transform_5, window_bounds = array<i64: 1, 64>}, {pipeline_mode = #tpu.pipeline_mode<synchronous>, transform_indices = @transform_6, window_bounds = array<i64: 1, 64>}, {pipeline_mode = #tpu.pipeline_mode<synchronous>, transform_indices = @transform_7, window_bounds = array<i64: 1, 64>}, {pipeline_mode = #tpu.pipeline_mode<synchronous>, transform_indices = @transform_8, window_bounds = array<i64: 1, 1>}, {pipeline_mode = #tpu.pipeline_mode<synchronous>, transform_indices = @transform_9, window_bounds = array<i64: 1, 1>}, {pipeline_mode = #tpu.pipeline_mode<synchronous>, transform_indices = @transform_10, window_bounds = array<i64: 1, 1>}, {transform_indices = @transform_11, window_bounds = array<i64: 8, 1>}]} {
    %c0 = arith.constant 0 : index
    %c0_0 = arith.constant 0 : index
    %0 = vector.load %arg1[%c0, %c0_0] : memref<8x1xf32, #tpu.memory_space<vmem>>, vector<8x1xf32>
    %c0_1 = arith.constant 0 : index
    %c0_2 = arith.constant 0 : index
    %1 = vector.load %arg2[%c0_1, %c0_2] : memref<1x64xf32, #tpu.memory_space<vmem>>, vector<1x64xf32>
    %2 = vector.broadcast %0 : vector<8x1xf32> to vector<8x64xf32>
    %3 = vector.broadcast %1 : vector<1x64xf32> to vector<8x64xf32>
    %4 = arith.mulf %2, %3 : vector<8x64xf32>
    %c0_3 = arith.constant 0 : index
    %c0_4 = arith.constant 0 : index
    %5 = vector.load %arg3[%c0_3, %c0_4] : memref<1x64xf32, #tpu.memory_space<vmem>>, vector<1x64xf32>
    %6 = vector.broadcast %5 : vector<1x64xf32> to vector<8x64xf32>
    %7 = arith.addf %4, %6 : vector<8x64xf32>
    %cst = arith.constant 0.000000e+00 : f32
    %8 = vector.broadcast %cst : f32 to vector<8x64xf32>
    %9 = arith.cmpf ogt, %7, %8 : vector<8x64xf32>
    %cst_5 = arith.constant 0.00999999977 : f32
    %10 = vector.broadcast %cst_5 : f32 to vector<8x64xf32>
    %11 = arith.mulf %10, %7 : vector<8x64xf32>
    %12 = arith.select %9, %7, %11 : vector<8x64xi1>, vector<8x64xf32>
    %c0_6 = arith.constant 0 : index
    %c0_7 = arith.constant 0 : index
    %13 = vector.load %arg4[%c0_6, %c0_7] : memref<64x64xf32, #tpu.memory_space<vmem>>, vector<64x64xf32>
    %cst_8 = arith.constant dense<0.000000e+00> : vector<8x64xf32>
    %14 = tpu.matmul %12, %13, %cst_8 {dimension_numbers = #tpu.dot_dimension_numbers<[1], [0], [0], [1], [0, 0, 1, 1], [], []>} : vector<8x64xf32>, vector<64x64xf32>, vector<8x64xf32> -> vector<8x64xf32>
    %c0_9 = arith.constant 0 : index
    %c0_10 = arith.constant 0 : index
    %15 = vector.load %arg5[%c0_9, %c0_10] : memref<1x64xf32, #tpu.memory_space<vmem>>, vector<1x64xf32>
    %16 = vector.broadcast %15 : vector<1x64xf32> to vector<8x64xf32>
    %17 = arith.addf %14, %16 : vector<8x64xf32>
    %cst_11 = arith.constant 0.000000e+00 : f32
    %18 = vector.broadcast %cst_11 : f32 to vector<8x64xf32>
    %19 = arith.cmpf ogt, %17, %18 : vector<8x64xf32>
    %cst_12 = arith.constant 0.00999999977 : f32
    %20 = vector.broadcast %cst_12 : f32 to vector<8x64xf32>
    %21 = arith.mulf %20, %17 : vector<8x64xf32>
    %22 = arith.select %19, %17, %21 : vector<8x64xi1>, vector<8x64xf32>
    %c0_13 = arith.constant 0 : index
    %c0_14 = arith.constant 0 : index
    %23 = vector.load %arg6[%c0_13, %c0_14] : memref<1x64xf32, #tpu.memory_space<vmem>>, vector<1x64xf32>
    %c0_15 = arith.constant 0 : index
    %c0_16 = arith.constant 0 : index
    %24 = vector.load %arg7[%c0_15, %c0_16] : memref<1x64xf32, #tpu.memory_space<vmem>>, vector<1x64xf32>
    %25 = math.absf %24 : vector<1x64xf32>
    %cst_17 = arith.constant 0.000000e+00 : f32
    %26 = vector.broadcast %cst_17 : f32 to vector<1x64xf32>
    %27 = arith.subf %26, %25 : vector<1x64xf32>
    %28 = math.exp %27 : vector<1x64xf32>
    %29 = math.log1p %28 : vector<1x64xf32>
    %cst_18 = arith.constant 0.000000e+00 : f32
    %30 = vector.broadcast %cst_18 : f32 to vector<1x64xf32>
    %31 = arith.maximumf %24, %30 : vector<1x64xf32>
    %32 = arith.addf %29, %31 : vector<1x64xf32>
    %c0_19 = arith.constant 0 : index
    %c0_20 = arith.constant 0 : index
    %33 = vector.load %arg8[%c0_19, %c0_20] : memref<1x64xf32, #tpu.memory_space<vmem>>, vector<1x64xf32>
    %34 = arith.mulf %32, %33 : vector<1x64xf32>
    %35 = arith.addf %23, %34 : vector<1x64xf32>
    %c0_21 = arith.constant 0 : index
    %c0_22 = arith.constant 0 : index
    %36 = vector.load %arg9[%c0_21, %c0_22] : memref<1x1xf32, #tpu.memory_space<vmem>>, vector<1x1xf32>
    %c0_23 = arith.constant 0 : index
    %c0_24 = arith.constant 0 : index
    %37 = vector.load %arg10[%c0_23, %c0_24] : memref<1x1xf32, #tpu.memory_space<vmem>>, vector<1x1xf32>
    %38 = math.absf %37 : vector<1x1xf32>
    %cst_25 = arith.constant 0.000000e+00 : f32
    %39 = vector.broadcast %cst_25 : f32 to vector<1x1xf32>
    %40 = arith.subf %39, %38 : vector<1x1xf32>
    %41 = math.exp %40 : vector<1x1xf32>
    %42 = math.log1p %41 : vector<1x1xf32>
    %cst_26 = arith.constant 0.000000e+00 : f32
    %43 = vector.broadcast %cst_26 : f32 to vector<1x1xf32>
    %44 = arith.maximumf %37, %43 : vector<1x1xf32>
    %45 = arith.addf %42, %44 : vector<1x1xf32>
    %c0_27 = arith.constant 0 : index
    %c0_28 = arith.constant 0 : index
    %46 = vector.load %arg11[%c0_27, %c0_28] : memref<1x1xf32, #tpu.memory_space<vmem>>, vector<1x1xf32>
    %47 = arith.mulf %45, %46 : vector<1x1xf32>
    %48 = arith.addf %36, %47 : vector<1x1xf32>
    %49 = vector.broadcast %35 : vector<1x64xf32> to vector<8x64xf32>
    %50 = arith.mulf %22, %49 : vector<8x64xf32>
    %cst_29 = arith.constant dense<0.000000e+00> : vector<8xf32>
    %51 = vector.multi_reduction <add>, %50, %cst_29 [1] : vector<8x64xf32> to vector<8xf32>
    %52 = vector.shape_cast %51 : vector<8xf32> to vector<8x1xf32>
    %53 = vector.broadcast %48 : vector<1x1xf32> to vector<8x1xf32>
    %54 = arith.addf %52, %53 : vector<8x1xf32>
    %c0_30 = arith.constant 0 : index
    %c0_31 = arith.constant 0 : index
    %55 = vector.load %arg12[%c0_30, %c0_31] : memref<8x1xf32, #tpu.memory_space<vmem>>, vector<8x1xf32>
    tpu.vector_store %arg12[%c0_30, %c0_31], %54 {strides = array<i32>} : memref<8x1xf32, #tpu.memory_space<vmem>>, vector<8x1xf32>,
    return
  }
  func.func @transform_0(%arg0: i32) -> (i32, i32) {
    %c0_i32 = arith.constant 0 : i32
    %c0_i32_0 = arith.constant 0 : i32
    return %arg0, %c0_i32 : i32, i32
  }
  func.func @transform_1(%arg0: i32) -> (i32, i32) {
    %c0_i32 = arith.constant 0 : i32
    %c0_i32_0 = arith.constant 0 : i32
    %c0_i32_1 = arith.constant 0 : i32
    return %c0_i32, %c0_i32_0 : i32, i32
  }
  func.func @transform_2(%arg0: i32) -> (i32, i32) {
    %c0_i32 = arith.constant 0 : i32
    %c0_i32_0 = arith.constant 0 : i32
    %c0_i32_1 = arith.constant 0 : i32
    return %c0_i32, %c0_i32_0 : i32, i32
  }
  func.func @transform_3(%arg0: i32) -> (i32, i32) {
    %c0_i32 = arith.constant 0 : i32
    %c0_i32_0 = arith.constant 0 : i32
    %c0_i32_1 = arith.constant 0 : i32
    return %c0_i32, %c0_i32_0 : i32, i32
  }
  func.func @transform_4(%arg0: i32) -> (i32, i32) {
    %c0_i32 = arith.constant 0 : i32
    %c0_i32_0 = arith.constant 0 : i32
    %c0_i32_1 = arith.constant 0 : i32
    return %c0_i32, %c0_i32_0 : i32, i32
  }
  func.func @transform_5(%arg0: i32) -> (i32, i32) {
    %c0_i32 = arith.constant 0 : i32
    %c0_i32_0 = arith.constant 0 : i32
    %c0_i32_1 = arith.constant 0 : i32
    return %c0_i32, %c0_i32_0 : i32, i32
  }
  func.func @transform_6(%arg0: i32) -> (i32, i32) {
    %c0_i32 = arith.constant 0 : i32
    %c0_i32_0 = arith.constant 0 : i32
    %c0_i32_1 = arith.constant 0 : i32
    return %c0_i32, %c0_i32_0 : i32, i32
  }
  func.func @transform_7(%arg0: i32) -> (i32, i32) {
    %c0_i32 = arith.constant 0 : i32
    %c0_i32_0 = arith.constant 0 : i32
    %c0_i32_1 = arith.constant 0 : i32
    return %c0_i32, %c0_i32_0 : i32, i32
  }
  func.func @transform_8(%arg0: i32) -> (i32, i32) {
    %c0_i32 = arith.constant 0 : i32
    %c0_i32_0 = arith.constant 0 : i32
    %c0_i32_1 = arith.constant 0 : i32
    return %c0_i32, %c0_i32_0 : i32, i32
  }
  func.func @transform_9(%arg0: i32) -> (i32, i32) {
    %c0_i32 = arith.constant 0 : i32
    %c0_i32_0 = arith.constant 0 : i32
    %c0_i32_1 = arith.constant 0 : i32
    return %c0_i32, %c0_i32_0 : i32, i32
  }
  func.func @transform_10(%arg0: i32) -> (i32, i32) {
    %c0_i32 = arith.constant 0 : i32
    %c0_i32_0 = arith.constant 0 : i32
    %c0_i32_1 = arith.constant 0 : i32
    return %c0_i32, %c0_i32_0 : i32, i32
  }
  func.func @transform_11(%arg0: i32) -> (i32, i32) {
    %c0_i32 = arith.constant 0 : i32
    %c0_i32_0 = arith.constant 0 : i32
    return %arg0, %c0_i32 : i32, i32
  }
}

</mosaic_0001>

<llo_original>
// kernel: tpu_custom_call.1
$region0: #{tpu_custom_call.1}
  #allocation0 [shape = 'u32[]', space=smem, size = 0x4, offset = 0x4, fixed_abs, tag = 'smem constant byte address 0x4 - core index']
  #allocation1 [shape = 'u32[144,128]{1,0:T(1,128)}', space=vmem, size = 0x12000, scoped, tag = 'internal scratch']
  #allocation2 [shape = 'f32[1,1]{1,0:T(1,128)S(1)}', space=vmem, size = 0x200, scoped, tag = 'scoped memory for tpu_custom_call.1']
  #allocation3 [shape = 'f32[1,1]{1,0:T(1,128)S(1)}', space=vmem, size = 0x200, scoped, tag = 'scoped memory for tpu_custom_call.1']
  #allocation4 [shape = 'f32[1,1]{1,0:T(1,128)S(1)}', space=vmem, size = 0x200, scoped, tag = 'scoped memory for tpu_custom_call.1']
  %s0 = inlined_call_operand.vmem [shape: f32[8,1], index: 0, kind: input, shape index: {}]
  %s1 = inlined_call_operand.vmem [shape: f32[1,64], index: 1, kind: input, shape index: {}]
  %s2 = inlined_call_operand.vmem [shape: f32[1,64], index: 2, kind: input, shape index: {}]
  %s3 = inlined_call_operand.hbm [shape: f32[64,64], index: 3, kind: input, shape index: {}]
  %s4 = inlined_call_operand.vmem [shape: f32[1,64], index: 4, kind: input, shape index: {}]
  %s5 = inlined_call_operand.vmem [shape: f32[1,64], index: 5, kind: input, shape index: {}]
  %s6 = inlined_call_operand.vmem [shape: f32[1,64], index: 6, kind: input, shape index: {}]
  %s7 = inlined_call_operand.vmem [shape: f32[1,64], index: 7, kind: input, shape index: {}]
  %s8 = inlined_call_operand.<no memory space> [shape: f32[1,1], index: 8, kind: input, shape index: {}]
  %s9 = inlined_call_operand.<no memory space> [shape: f32[1,1], index: 9, kind: input, shape index: {}]
  %s10 = inlined_call_operand.<no memory space> [shape: f32[1,1], index: 10, kind: input, shape index: {}]
  %s11 = inlined_call_operand.vmem [shape: f32[8,1], index: 11, kind: output, shape index: {}]
  %s12 = sld [smem:[#allocation0]]
  $region58: #{tpu_custom_call.1} parent=0
    _
  %s14 = ssub.s32 1, %s12
  %s15 = scalar_select 0, %s14, %s12
  %v16 = vstv %s8
  %17 = vst [vmem:[#allocation2] sm:$0x1] %v16
  %v18 = vstv %s9
  %19 = vst [vmem:[#allocation3] sm:$0x1] %v18
  %v20 = vstv %s10
  %21 = vst [vmem:[#allocation4] sm:$0x1] %v20
  $region1: #{tpu_custom_call.1} parent=0
    #allocation5 [shape = 'u8[32768]{0}', space=vmem, size = 0x8000, scoped, tag = 'input window, operand 3, single buffered']
    #allocation6 [shape = 's32[1]{0}', space=sflag, size = 0x4, scoped, tag = 'scoped memory for tpu_custom_call.1']
    %22 = vsyncpa [#allocation6], 0
    // Predicated region
    $region2: #{tpu_custom_call.1} parent=1 // pred_check
      _
    $region3: #{tpu_custom_call.1} parent=1 // pred_check_branch
      %24 = sbr.rel (0) target = $region5
    $region4: #{tpu_custom_call.1} parent=1 // pred_region
      _
    $region5: #{tpu_custom_call.1} parent=1 // pred_fallthru
      _
    // Predicated region
    $region6: #{tpu_custom_call.1} parent=1 // pred_check
      _
    $region7: #{tpu_custom_call.1} parent=1 // pred_check_branch
      %26 = sbr.rel (0) target = $region9
    $region8: #{tpu_custom_call.1} parent=1 // pred_region
      _
    $region9: #{tpu_custom_call.1} parent=1 // pred_fallthru
      _
    // Predicated region
    $region10: #{tpu_custom_call.1} parent=1 // pred_check
      _
    $region11: #{tpu_custom_call.1} parent=1 // pred_check_branch
      %28 = sbr.rel (0) target = $region13
    $region12: #{tpu_custom_call.1} parent=1 // pred_region
      _
    $region13: #{tpu_custom_call.1} parent=1 // pred_fallthru
      _
    // Predicated region
    $region14: #{tpu_custom_call.1} parent=1 // pred_check
      _
    $region15: #{tpu_custom_call.1} parent=1 // pred_check_branch
      %30 = sbr.rel (0) target = $region17
    $region16: #{tpu_custom_call.1} parent=1 // pred_region
      %s32 = ssub.s32 1024, 1024
      %33 = vsyncadd [#allocation6], %s32
      %s34 = sshll.u32 [#allocation5], 4
      %s35 = int_to_ptr.vmem [resolvable:$true] %s34
      %40 = dma.hbm_to_vmem [thread:$0]  %s3, 1024, %s35, [#allocation6], 128, 128, 8
    $region17: #{tpu_custom_call.1} parent=1 // pred_fallthru
      _
    // Predicated region
    $region18: #{tpu_custom_call.1} parent=1 // pred_check
      _
    $region19: #{tpu_custom_call.1} parent=1 // pred_check_branch
      %42 = sbr.rel (0) target = $region21
    $region20: #{tpu_custom_call.1} parent=1 // pred_region
      _
    $region21: #{tpu_custom_call.1} parent=1 // pred_fallthru
      _
    // Predicated region
    $region22: #{tpu_custom_call.1} parent=1 // pred_check
      _
    $region23: #{tpu_custom_call.1} parent=1 // pred_check_branch
      %44 = sbr.rel (0) target = $region25
    $region24: #{tpu_custom_call.1} parent=1 // pred_region
      _
    $region25: #{tpu_custom_call.1} parent=1 // pred_fallthru
      _
    // Predicated region
    $region26: #{tpu_custom_call.1} parent=1 // pred_check
      _
    $region27: #{tpu_custom_call.1} parent=1 // pred_check_branch
      %46 = sbr.rel (0) target = $region29
    $region28: #{tpu_custom_call.1} parent=1 // pred_region
      _
    $region29: #{tpu_custom_call.1} parent=1 // pred_fallthru
      _
    // Predicated region
    $region30: #{tpu_custom_call.1} parent=1 // pred_check
      _
    $region31: #{tpu_custom_call.1} parent=1 // pred_check_branch
      %48 = sbr.rel (0) target = $region33
    $region32: #{tpu_custom_call.1} parent=1 // pred_region
      _
    $region33: #{tpu_custom_call.1} parent=1 // pred_fallthru
      _
    // Predicated region
    $region34: #{tpu_custom_call.1} parent=1 // pred_check
      _
    $region35: #{tpu_custom_call.1} parent=1 // pred_check_branch
      %50 = sbr.rel (0) target = $region37
    $region36: #{tpu_custom_call.1} parent=1 // pred_region
      _
    $region37: #{tpu_custom_call.1} parent=1 // pred_fallthru
      _
    // Predicated region
    $region38: #{tpu_custom_call.1} parent=1 // pred_check
      _
    $region39: #{tpu_custom_call.1} parent=1 // pred_check_branch
      %52 = sbr.rel (0) target = $region41
    $region40: #{tpu_custom_call.1} parent=1 // pred_region
      _
    $region41: #{tpu_custom_call.1} parent=1 // pred_fallthru
      _
    // Predicated region
    $region42: #{tpu_custom_call.1} parent=1 // pred_check
      _
    $region43: #{tpu_custom_call.1} parent=1 // pred_check_branch
      %54 = sbr.rel (0) target = $region45
    $region44: #{tpu_custom_call.1} parent=1 // pred_region
      _
    $region45: #{tpu_custom_call.1} parent=1 // pred_fallthru
      _
    // Predicated region
    $region46: #{tpu_custom_call.1} parent=1 // pred_check
      _
    $region47: #{tpu_custom_call.1} parent=1 // pred_check_branch
      %56 = sbr.rel (0) target = $region49
    $region48: #{tpu_custom_call.1} parent=1 // pred_region
      %57 = dma.done [#allocation6], 1024
    $region49: #{tpu_custom_call.1} parent=1 // pred_fallthru
      _
    %v58 = vld [vmem:[%s0] sm:$0xff]
    %v59 = vld [vmem:[%s1] sm:$0x1]
    %61 = vset.pattern.permute.xlu0 0
    %62 = vperm.xlu0 %61, %v58
    %v63 = vpop.permute.xlu0 %62
    %v66 = vlaneseq
    %v67 = vshrl.u32 %v66, 7
    %v68 = vsub.s32 0, %v67
    %v69 = vrot.slane %v59, %v68
    %v71 = vmul.f32 %v63, %v69
    %v72 = vld [vmem:[%s2] sm:$0x1]
    %v74 = vlaneseq
    %v75 = vshrl.u32 %v74, 7
    %v76 = vsub.s32 0, %v75
    %v77 = vrot.slane %v72, %v76
    %v79 = vadd.f32 %v71, %v77
    %vm80 = vcmp.gt.f32.partialorder %v79, 0.0
    %v81 = vmul.f32 %v79, 0.01
    %v82 = vsel %vm80, %v79, %v81
    %v83 = vld [vmem:[#allocation5] sm:$0xff]
    %v84 = vld [vmem:[#allocation5 + $0x8] sm:$0xff]
    %v85 = vld [vmem:[#allocation5 + $0x10] sm:$0xff]
    %v86 = vld [vmem:[#allocation5 + $0x18] sm:$0xff]
    %v87 = vld [vmem:[#allocation5 + $0x20] sm:$0xff]
    %v88 = vld [vmem:[#allocation5 + $0x28] sm:$0xff]
    %v89 = vld [vmem:[#allocation5 + $0x30] sm:$0xff]
    %v90 = vld [vmem:[#allocation5 + $0x38] sm:$0xff]
    %v91 = vld [vmem:[%s4] sm:$0x1]
    %v93 = vlaneseq
    %v94 = vshrl.u32 %v93, 7
    %v95 = vsub.s32 0, %v94
    %v96 = vrot.slane %v91, %v95
    %vm98 = vcmask 523264
    %v100 = vsel %vm98, %v82, 0
    %102 = vmatprep.subr.mxu0 0.0
    %103 = vmatpush1.msra.mxu0 0.0
    %104 = vmatprep.subr.mxu0 0.0
    %105 = vmatpush1.msra.mxu0 0.0
    %106 = vmatprep.subr.mxu0 0.0
    %107 = vmatpush1.msra.mxu0 0.0
    %108 = vmatprep.subr.mxu0 0.0
    %109 = vmatpush1.msra.mxu0 0.0
    %110 = vmatprep.subr.mxu0 0.0
    %111 = vmatpush1.msra.mxu0 0.0
    %112 = vmatprep.subr.mxu0 0.0
    %113 = vmatpush1.msra.mxu0 0.0
    %114 = vmatprep.subr.mxu0 0.0
    %115 = vmatpush1.msra.mxu0 0.0
    %116 = vmatprep.subr.mxu0 0.0
    %117 = vmatpush1.msra.mxu0 0.0
    %118 = vmatprep.subr.mxu0 0.0
    %119 = vmatpush1.msra.mxu0 %v90
    %120 = vmatprep.subr.mxu0 0.0
    %121 = vmatpush1.msra.mxu0 %v89
    %122 = vmatprep.subr.mxu0 0.0
    %123 = vmatpush1.msra.mxu0 %v88
    %124 = vmatprep.subr.mxu0 0.0
    %125 = vmatpush1.msra.mxu0 %v87
    %126 = vmatprep.subr.mxu0 0.0
    %127 = vmatpush1.msra.mxu0 %v86
    %128 = vmatprep.subr.mxu0 0.0
    %129 = vmatpush1.msra.mxu0 %v85
    %130 = vmatprep.subr.mxu0 0.0
    %131 = vmatpush1.msra.mxu0 %v84
    %132 = vmatprep.subr.mxu0 0.0
    %133 = vmatpush1.msra.mxu0 %v83
    %134 = vmatprep.subr.mxu0 0.0
    %135 = vmatpush2.msra.mxu0 0.0
    %136 = vmatprep.subr.mxu0 0.0
    %137 = vmatpush2.msra.mxu0 0.0
    %138 = vmatprep.subr.mxu0 0.0
    %139 = vmatpush2.msra.mxu0 0.0
    %140 = vmatprep.subr.mxu0 0.0
    %141 = vmatpush2.msra.mxu0 0.0
    %142 = vmatprep.subr.mxu0 0.0
    %143 = vmatpush2.msra.mxu0 0.0
    %144 = vmatprep.subr.mxu0 0.0
    %145 = vmatpush2.msra.mxu0 0.0
    %146 = vmatprep.subr.mxu0 0.0
    %147 = vmatpush2.msra.mxu0 0.0
    %148 = vmatprep.subr.mxu0 0.0
    %149 = vmatpush2.msra.mxu0 0.0
    %150 = vmatprep.subr.mxu0 0.0
    %151 = vmatpush2.msra.mxu0 0.0
    %152 = vmatprep.subr.mxu0 0.0
    %153 = vmatpush2.msra.mxu0 0.0
    %154 = vmatprep.subr.mxu0 0.0
    %155 = vmatpush2.msra.mxu0 0.0
    %156 = vmatprep.subr.mxu0 0.0
    %157 = vmatpush2.msra.mxu0 0.0
    %158 = vmatprep.subr.mxu0 0.0
    %159 = vmatpush2.msra.mxu0 0.0
    %160 = vmatprep.subr.mxu0 0.0
    %161 = vmatpush2.msra.mxu0 0.0
    %162 = vmatprep.subr.mxu0 0.0
    %163 = vmatpush2.msra.mxu0 0.0
    %164 = vmatprep.subr.mxu0 0.0
    %165 = vmatpush2.msra.mxu0 0.0
    %166 = vmatprep.mubr.f32.mxu0 0.0
    %167 = vmatmul.mubr.f32.gmra.mxu0 %v100
    %v168 = vpop.f32.mrf.mxu0
    %v169 = vadd.f32 %v96, %v168
    %v170 = vpop.f32.mrf.mxu0
    %171 = vdwg.mxu0
    %vm172 = vcmp.gt.f32.partialorder %v169, 0.0
    %v173 = vmul.f32 %v169, 0.01
    %v174 = vsel %vm172, %v169, %v173
    %v175 = vld [vmem:[%s5] sm:$0x1]
    %v176 = vld [vmem:[%s6] sm:$0x1]
    %v177 = vand.u32 2147483647, %v176
    %v178 = vsub.f32 0.0, %v177
    %v179 = vmul.f32 %v178, 1.442695
    %v180 = vpow.pop %v179
    %v181 = vadd.f32 %v180, 1.0
    %v182 = vlog2.pop %v181
    %v183 = vmul.f32 %v182, 0.6931472
    %v184 = vmul.f32 -0.5, %v180
    %v185 = vadd.f32 %v184, 1.0
    %v186 = vmul.f32 %v185, %v180
    %v187 = vand.u32 2147483647, %v180
    %vm188 = vcmp.lt.f32.partialorder %v187, 0.0004427343
    %v189 = vsel %vm188, %v186, %v183
    %v190 = vmax.f32 %v176, 0.0
    %v191 = vadd.f32 %v189, %v190
    %v192 = vld [vmem:[%s7] sm:$0x1]
    %v193 = vmul.f32 %v191, %v192
    %v194 = vadd.f32 %v175, %v193
    %v195 = vld [vmem:[#allocation2] sm:$0x1]
    %v196 = vld [vmem:[#allocation3] sm:$0x1]
    %v197 = vand.u32 2147483647, %v196
    %v198 = vsub.f32 0.0, %v197
    %v199 = vmul.f32 %v198, 1.442695
    %v200 = vpow.pop %v199
    %v201 = vadd.f32 %v200, 1.0
    %v202 = vlog2.pop %v201
    %v203 = vmul.f32 %v202, 0.6931472
    %v204 = vmul.f32 -0.5, %v200
    %v205 = vadd.f32 %v204, 1.0
    %v206 = vmul.f32 %v205, %v200
    %v207 = vand.u32 2147483647, %v200
    %vm208 = vcmp.lt.f32.partialorder %v207, 0.0004427343
    %v209 = vsel %vm208, %v206, %v203
    %v210 = vmax.f32 %v196, 0.0
    %v211 = vadd.f32 %v209, %v210
    %v212 = vld [vmem:[#allocation4] sm:$0x1]
    %v213 = vmul.f32 %v211, %v212
    %v214 = vadd.f32 %v195, %v213
    %v216 = vlaneseq
    %v217 = vshrl.u32 %v216, 7
    %v218 = vsub.s32 0, %v217
    %v219 = vrot.slane %v194, %v218
    %v221 = vmul.f32 %v174, %v219
    %v222 = vsel %vm98, %v221, 0.0
    %223 = vadd.xlane.f32.xlu0 %v222
    %v224 = vpop.xlane.xlu0 %223
    %v226 = vlaneseq
    %v227 = vshrl.u32 %v226, 7
    %v228 = vsub.s32 0, %v227
    %v229 = vrot.slane %v214, %v228
    %v231 = vadd.f32 %v224, %v229
    %vm232 = vcmask 7168
    %233 = vst.msk [vmem:[%s11] sm:$0xff] %vm232, %v231
    // Predicated region
    $region50: #{tpu_custom_call.1} parent=1 // pred_check
      _
    $region51: #{tpu_custom_call.1} parent=1 // pred_check_branch
      %235 = sbr.rel (0) target = $region53
    $region52: #{tpu_custom_call.1} parent=1 // pred_region
      _
    $region53: #{tpu_custom_call.1} parent=1 // pred_fallthru
      _
    // Predicated region
    $region54: #{tpu_custom_call.1} parent=1 // pred_check
      _
    $region55: #{tpu_custom_call.1} parent=1 // pred_check_branch
      %237 = sbr.rel (0) target = $region57
    $region56: #{tpu_custom_call.1} parent=1 // pred_region
      _
    $region57: #{tpu_custom_call.1} parent=1 // pred_fallthru
      _
    %238 = vsyncpa [#allocation6], 1

</llo_original>
